<compile_context>
chip_gen: v7x
topology: tpu7x:2x2x1
jax: 0.10.0
libtpu: 0.0.40
codegen_flags: <defaults>
</compile_context>

<pallas_src>
import functools

import jax
import jax.numpy as jnp
from jax.experimental import pallas as pl
from jax.experimental.pallas import tpu as pltpu

FEAT = 128          # lane-dense padded width for hidden features / weights
NUM_LAYERS = 4


def _round_up(x, m):
    return (x + m - 1) // m * m


def _mlp_kernel(x_ref, w_ref, b_ref, o_ref):
    # x_ref: (tm, d_in) f32   w_ref: (4, 128, 128) bf16
    # b_ref: (4, 128)  f32    o_ref: (tm, d_out)   f32
    d_in = x_ref.shape[1]
    d_out = o_ref.shape[1]

    h = x_ref[...].astype(jnp.bfloat16)

    # Layer 1: (tm, d_in) @ (d_in, 128) + b, ReLU
    w0 = w_ref[0][:d_in, :]
    h = jnp.dot(h, w0, preferred_element_type=jnp.float32) + b_ref[0:1, :]
    h = jnp.maximum(h, 0.0)

    # Layers 2 and 3: (tm, 128) @ (128, 128) + b, ReLU (padded lanes stay 0)
    h = jnp.maximum(
        jnp.dot(h.astype(jnp.bfloat16), w_ref[1],
                preferred_element_type=jnp.float32) + b_ref[1:2, :], 0.0)
    h = jnp.maximum(
        jnp.dot(h.astype(jnp.bfloat16), w_ref[2],
                preferred_element_type=jnp.float32) + b_ref[2:3, :], 0.0)

    # Output layer (no activation): full 128-lane MXU pass (same pass count as
    # N=d_out), then slice the real columns for a narrow store.
    y = (jnp.dot(h.astype(jnp.bfloat16), w_ref[3],
                 preferred_element_type=jnp.float32) + b_ref[3:4, :])
    o_ref[...] = y[:, :d_out].astype(o_ref.dtype)


def pack_generator_params(params):
    """One-time packing of per-layer (W (Din,Dout), b (1,Dout)) into slabs.

    Weights are stored in bf16 (MXU operands); biases stay f32 (added onto the
    f32 accumulator).  Call once at init and reuse for every forward call.
    """
    w_slab = jnp.zeros((NUM_LAYERS, FEAT, FEAT), jnp.float32)
    b_slab = jnp.zeros((NUM_LAYERS, FEAT), jnp.float32)
    for l, (w, b) in enumerate(params):
        d_in, d_out = w.shape
        w_slab = w_slab.at[l, :d_in, :d_out].set(w)
        b_slab = b_slab.at[l, :d_out].set(b.reshape(-1))
    return w_slab.astype(jnp.bfloat16), b_slab


def _choose_tile(n8, tile_m):
    tm = min(n8, _round_up(tile_m, 8))
    # v7x has 2 TensorCores: once the batch is big enough, make sure the
    # "parallel" grid axis has at least 2 steps.
    if -(-n8 // tm) < 2 and n8 >= 1024:
        tm = _round_up(-(-n8 // 2), 8)
    return tm


@functools.partial(jax.jit, static_argnames=("d_out", "tile_m"))
def generator_forward(x, w_slab, b_slab, *, d_out, tile_m=1024):
    """x: (N, D_in) f32; slabs from pack_generator_params; returns (N, d_out)."""
    n, d_in = x.shape
    n8 = _round_up(n, 8)
    if n8 != n:  # tiny sublane row-pad only; no lane padding, no full-tile pad
        x = jnp.pad(x, ((0, n8 - n), (0, 0)))

    tm = _choose_tile(n8, tile_m)
    grid = (-(-n8 // tm),)  # partial trailing block (if any) is masked by Pallas

    out = pl.pallas_call(
        _mlp_kernel,
        out_shape=jax.ShapeDtypeStruct((n8, d_out), jnp.float32),
        grid_spec=pltpu.PrefetchScalarGridSpec(
            num_scalar_prefetch=0,
            grid=grid,
            in_specs=[
                pl.BlockSpec((tm, d_in), lambda i: (i, 0)),
                # Constant index_maps: weights/biases stay resident across the
                # grid (Pallas does not re-fetch unchanged blocks).
                pl.BlockSpec((NUM_LAYERS, FEAT, FEAT), lambda i: (0, 0, 0)),
                pl.BlockSpec((NUM_LAYERS, FEAT), lambda i: (0, 0)),
            ],
            out_specs=pl.BlockSpec((tm, d_out), lambda i: (i, 0)),
        ),
        compiler_params=pltpu.CompilerParams(
            dimension_semantics=("parallel",)),
    )(x, w_slab, b_slab)

    return out[:n] if n8 != n else out


def init_generator_params(key, input_dim, output_dim, hidden_dims=(8, 8, 8)):
    """Deterministic PyTorch-style (uniform +-1/sqrt(fan_in)) init."""
    dims_in = [input_dim, *hidden_dims[:-1], hidden_dims[-1]]
    dims_out = [*hidden_dims, output_dim]
    params = []
    for d_in, d_out in zip(dims_in, dims_out):
        key, kw, kb = jax.random.split(key, 3)
        bound = 1.0 / (d_in ** 0.5)
        w = jax.random.uniform(kw, (d_in, d_out), jnp.float32, -bound, bound)
        b = jax.random.uniform(kb, (1, d_out), jnp.float32, -bound, bound)
        params.append((w, b))
    return params


def generator_forward_ref(x, params):
    """Pure-JAX f32 reference of the PyTorch forward pass."""
    (w1, b1), (w2, b2), (w3, b3), (w4, b4) = params
    h = jnp.maximum(x @ w1 + b1, 0.0)
    h = jnp.maximum(h @ w2 + b2, 0.0)
    h = jnp.maximum(h @ w3 + b3, 0.0)
    return h @ w4 + b4


if __name__ == "__main__":
    key = jax.random.PRNGKey(0)
    k_params, k_x = jax.random.split(key)

    generator_input_dim = 16
    generator_output_dim = 4
    batch = 32

    params = init_generator_params(k_params, generator_input_dim,
                                   generator_output_dim, hidden_dims=(8, 8, 8))
    # One-time packing (hoisted out of the per-call path).
    w_slab, b_slab = pack_generator_params(params)

    # "generate_generator_input": standard normal noise of shape (N, input_dim)
    x = jax.random.normal(k_x, (batch, generator_input_dim), jnp.float32)

    out = generator_forward(x, w_slab, b_slab, d_out=generator_output_dim)
    out = jax.block_until_ready(out)

    ref = generator_forward_ref(x, params)
    assert out.shape == (batch, generator_output_dim)
    # bf16 MXU operands with f32 accumulation -> loosened tolerance vs f32 ref.
    assert jnp.allclose(out, ref, atol=3e-2, rtol=3e-2), "mismatch vs reference"

    print("KERNEL_OK")
</pallas_src>

<mosaic_0001>
module attributes {stable_mosaic.version = 11 : i64} {
  func.func @_mlp_kernel(%arg0: i32, %arg1: memref<32x16xf32, #tpu.memory_space<vmem>>, %arg2: memref<4x128x128xbf16, #tpu.memory_space<vmem>>, %arg3: memref<4x128xf32, #tpu.memory_space<vmem>>, %arg4: memref<32x4xf32, #tpu.memory_space<vmem>>) attributes {dimension_semantics = [#tpu.dimension_semantics<parallel>], iteration_bounds = array<i64: 1>, scalar_prefetch = 0 : i64, scratch_operands = 0 : i64, tpu.core_type = #tpu.core_type<tc>, window_params = [{transform_indices = @transform_0, window_bounds = array<i64: 32, 16>}, {pipeline_mode = #tpu.pipeline_mode<synchronous>, transform_indices = @transform_1, window_bounds = array<i64: 4, 128, 128>}, {pipeline_mode = #tpu.pipeline_mode<synchronous>, transform_indices = @transform_2, window_bounds = array<i64: 4, 128>}, {transform_indices = @transform_3, window_bounds = array<i64: 32, 4>}]} {
    %c0 = arith.constant 0 : index
    %c0_0 = arith.constant 0 : index
    %0 = vector.load %arg1[%c0, %c0_0] : memref<32x16xf32, #tpu.memory_space<vmem>>, vector<32x16xf32>
    %1 = arith.truncf %0 : vector<32x16xf32> to vector<32x16xbf16>
    %c0_1 = arith.constant 0 : index
    %c0_2 = arith.constant 0 : index
    %c0_3 = arith.constant 0 : index
    %2 = vector.load %arg2[%c0_1, %c0_2, %c0_3] : memref<4x128x128xbf16, #tpu.memory_space<vmem>>, vector<1x128x128xbf16>
    %3 = vector.shape_cast %2 : vector<1x128x128xbf16> to vector<128x128xbf16>
    %4 = vector.extract_strided_slice %3 {offsets = [0, 0], sizes = [16, 128], strides = [1, 1]} : vector<128x128xbf16> to vector<16x128xbf16>
    %cst = arith.constant dense<0.000000e+00> : vector<32x128xf32>
    %5 = tpu.matmul %1, %4, %cst {dimension_numbers = #tpu.dot_dimension_numbers<[1], [0], [0], [1], [0, 0, 1, 1], [], []>} : vector<32x16xbf16>, vector<16x128xbf16>, vector<32x128xf32> -> vector<32x128xf32>
    %c0_4 = arith.constant 0 : index
    %c0_5 = arith.constant 0 : index
    %6 = vector.load %arg3[%c0_4, %c0_5] : memref<4x128xf32, #tpu.memory_space<vmem>>, vector<1x128xf32>
    %7 = vector.broadcast %6 : vector<1x128xf32> to vector<32x128xf32>
    %8 = arith.addf %5, %7 : vector<32x128xf32>
    %cst_6 = arith.constant 0.000000e+00 : f32
    %9 = vector.broadcast %cst_6 : f32 to vector<32x128xf32>
    %10 = arith.maximumf %8, %9 : vector<32x128xf32>
    %11 = arith.truncf %10 : vector<32x128xf32> to vector<32x128xbf16>
    %c1 = arith.constant 1 : index
    %c0_7 = arith.constant 0 : index
    %c0_8 = arith.constant 0 : index
    %12 = vector.load %arg2[%c1, %c0_7, %c0_8] : memref<4x128x128xbf16, #tpu.memory_space<vmem>>, vector<1x128x128xbf16>
    %13 = vector.shape_cast %12 : vector<1x128x128xbf16> to vector<128x128xbf16>
    %cst_9 = arith.constant dense<0.000000e+00> : vector<32x128xf32>
    %14 = tpu.matmul %11, %13, %cst_9 {dimension_numbers = #tpu.dot_dimension_numbers<[1], [0], [0], [1], [0, 0, 1, 1], [], []>} : vector<32x128xbf16>, vector<128x128xbf16>, vector<32x128xf32> -> vector<32x128xf32>
    %c1_10 = arith.constant 1 : index
    %c0_11 = arith.constant 0 : index
    %15 = vector.load %arg3[%c1_10, %c0_11] : memref<4x128xf32, #tpu.memory_space<vmem>>, vector<1x128xf32>
    %16 = vector.broadcast %15 : vector<1x128xf32> to vector<32x128xf32>
    %17 = arith.addf %14, %16 : vector<32x128xf32>
    %cst_12 = arith.constant 0.000000e+00 : f32
    %18 = vector.broadcast %cst_12 : f32 to vector<32x128xf32>
    %19 = arith.maximumf %17, %18 : vector<32x128xf32>
    %20 = arith.truncf %19 : vector<32x128xf32> to vector<32x128xbf16>
    %c2 = arith.constant 2 : index
    %c0_13 = arith.constant 0 : index
    %c0_14 = arith.constant 0 : index
    %21 = vector.load %arg2[%c2, %c0_13, %c0_14] : memref<4x128x128xbf16, #tpu.memory_space<vmem>>, vector<1x128x128xbf16>
    %22 = vector.shape_cast %21 : vector<1x128x128xbf16> to vector<128x128xbf16>
    %cst_15 = arith.constant dense<0.000000e+00> : vector<32x128xf32>
    %23 = tpu.matmul %20, %22, %cst_15 {dimension_numbers = #tpu.dot_dimension_numbers<[1], [0], [0], [1], [0, 0, 1, 1], [], []>} : vector<32x128xbf16>, vector<128x128xbf16>, vector<32x128xf32> -> vector<32x128xf32>
    %c2_16 = arith.constant 2 : index
    %c0_17 = arith.constant 0 : index
    %24 = vector.load %arg3[%c2_16, %c0_17] : memref<4x128xf32, #tpu.memory_space<vmem>>, vector<1x128xf32>
    %25 = vector.broadcast %24 : vector<1x128xf32> to vector<32x128xf32>
    %26 = arith.addf %23, %25 : vector<32x128xf32>
    %cst_18 = arith.constant 0.000000e+00 : f32
    %27 = vector.broadcast %cst_18 : f32 to vector<32x128xf32>
    %28 = arith.maximumf %26, %27 : vector<32x128xf32>
    %29 = arith.truncf %28 : vector<32x128xf32> to vector<32x128xbf16>
    %c3 = arith.constant 3 : index
    %c0_19 = arith.constant 0 : index
    %c0_20 = arith.constant 0 : index
    %30 = vector.load %arg2[%c3, %c0_19, %c0_20] : memref<4x128x128xbf16, #tpu.memory_space<vmem>>, vector<1x128x128xbf16>
    %31 = vector.shape_cast %30 : vector<1x128x128xbf16> to vector<128x128xbf16>
    %cst_21 = arith.constant dense<0.000000e+00> : vector<32x128xf32>
    %32 = tpu.matmul %29, %31, %cst_21 {dimension_numbers = #tpu.dot_dimension_numbers<[1], [0], [0], [1], [0, 0, 1, 1], [], []>} : vector<32x128xbf16>, vector<128x128xbf16>, vector<32x128xf32> -> vector<32x128xf32>
    %c3_22 = arith.constant 3 : index
    %c0_23 = arith.constant 0 : index
    %33 = vector.load %arg3[%c3_22, %c0_23] : memref<4x128xf32, #tpu.memory_space<vmem>>, vector<1x128xf32>
    %34 = vector.broadcast %33 : vector<1x128xf32> to vector<32x128xf32>
    %35 = arith.addf %32, %34 : vector<32x128xf32>
    %36 = vector.extract_strided_slice %35 {offsets = [0, 0], sizes = [32, 4], strides = [1, 1]} : vector<32x128xf32> to vector<32x4xf32>
    %c0_24 = arith.constant 0 : index
    %c0_25 = arith.constant 0 : index
    %37 = vector.load %arg4[%c0_24, %c0_25] : memref<32x4xf32, #tpu.memory_space<vmem>>, vector<32x4xf32>
    tpu.vector_store %arg4[%c0_24, %c0_25], %36 {strides = array<i32>} : memref<32x4xf32, #tpu.memory_space<vmem>>, vector<32x4xf32>,
    return
  }
  func.func @transform_0(%arg0: i32) -> (i32, i32) {
    %c0_i32 = arith.constant 0 : i32
    %c0_i32_0 = arith.constant 0 : i32
    return %arg0, %c0_i32 : i32, i32
  }
  func.func @transform_1(%arg0: i32) -> (i32, i32, i32) {
    %c0_i32 = arith.constant 0 : i32
    %c0_i32_0 = arith.constant 0 : i32
    %c0_i32_1 = arith.constant 0 : i32
    %c0_i32_2 = arith.constant 0 : i32
    return %c0_i32, %c0_i32_0, %c0_i32_1 : i32, i32, i32
  }
  func.func @transform_2(%arg0: i32) -> (i32, i32) {
    %c0_i32 = arith.constant 0 : i32
    %c0_i32_0 = arith.constant 0 : i32
    %c0_i32_1 = arith.constant 0 : i32
    return %c0_i32, %c0_i32_0 : i32, i32
  }
  func.func @transform_3(%arg0: i32) -> (i32, i32) {
    %c0_i32 = arith.constant 0 : i32
    %c0_i32_0 = arith.constant 0 : i32
    return %arg0, %c0_i32 : i32, i32
  }
}

</mosaic_0001>

<llo_original>
// kernel: generator_forward.1
$region0: #{generator_forward.1}
  #allocation0 [shape = 'u32[]', space=smem, size = 0x4, offset = 0x4, fixed_abs, tag = 'smem constant byte address 0x4 - core index']
  #allocation1 [shape = 'u32[144,128]{1,0:T(1,128)}', space=vmem, size = 0x12000, scoped, tag = 'internal scratch']
  %s0 = inlined_call_operand.vmem [shape: f32[32,16], index: 0, kind: input, shape index: {}]
  %s1 = inlined_call_operand.hbm [shape: bf16[4,128,128], index: 1, kind: input, shape index: {}]
  %s2 = inlined_call_operand.vmem [shape: f32[4,128], index: 2, kind: input, shape index: {}]
  %s3 = inlined_call_operand.vmem [shape: f32[32,4], index: 3, kind: output, shape index: {}]
  %s4 = sld [smem:[#allocation0]]
  $region26: #{generator_forward.1} parent=0
    _
  %s6 = ssub.s32 1, %s4
  %s7 = scalar_select 0, %s6, %s4
  $region1: #{generator_forward.1} parent=0
    #allocation2 [shape = 'u8[131072]{0}', space=vmem, size = 0x20000, scoped, tag = 'input window, operand 1, single buffered']
    #allocation3 [shape = 's32[1]{0}', space=sflag, size = 0x4, scoped, tag = 'scoped memory for generator_forward.1']
    %8 = vsyncpa [#allocation3], 0
    // Predicated region
    $region2: #{generator_forward.1} parent=1 // pred_check
      _
    $region3: #{generator_forward.1} parent=1 // pred_check_branch
      %10 = sbr.rel (0) target = $region5
    $region4: #{generator_forward.1} parent=1 // pred_region
      _
    $region5: #{generator_forward.1} parent=1 // pred_fallthru
      _
    // Predicated region
    $region6: #{generator_forward.1} parent=1 // pred_check
      _
    $region7: #{generator_forward.1} parent=1 // pred_check_branch
      %12 = sbr.rel (0) target = $region9
    $region8: #{generator_forward.1} parent=1 // pred_region
      %s14 = ssub.s32 4096, 4096
      %15 = vsyncadd [#allocation3], %s14
      %s16 = sshll.u32 [#allocation2], 4
      %s17 = int_to_ptr.vmem [resolvable:$true] %s16
      %22 = dma.hbm_to_vmem [thread:$0]  %s1, 4096, %s17, [#allocation3], 64, 64, 4
    $region9: #{generator_forward.1} parent=1 // pred_fallthru
      _
    // Predicated region
    $region10: #{generator_forward.1} parent=1 // pred_check
      _
    $region11: #{generator_forward.1} parent=1 // pred_check_branch
      %24 = sbr.rel (0) target = $region13
    $region12: #{generator_forward.1} parent=1 // pred_region
      _
    $region13: #{generator_forward.1} parent=1 // pred_fallthru
      _
    // Predicated region
    $region14: #{generator_forward.1} parent=1 // pred_check
      _
    $region15: #{generator_forward.1} parent=1 // pred_check_branch
      %26 = sbr.rel (0) target = $region17
    $region16: #{generator_forward.1} parent=1 // pred_region
      %27 = dma.done [#allocation3], 4096
    $region17: #{generator_forward.1} parent=1 // pred_fallthru
      _
    %v29 = vld [vmem:[%s0] sm:$0xff]
    %v30 = vld [vmem:[%s0 + $0x8] sm:$0xff]
    %v31 = vld [vmem:[%s0 + $0x10] sm:$0xff]
    %v32 = vld [vmem:[%s0 + $0x18] sm:$0xff]
    %v33 = vpack.c.bf16 %v30, %v29
    %v34 = vpack.c.bf16 %v32, %v31
    %v35 = vld [vmem:[#allocation2] sm:$0xf]
    %v36 = vld [vmem:[#allocation2 + $0x4] sm:$0xf]
    %v37 = vld [vmem:[%s2] sm:$0x1]
    %v38 = vlaneseq
    %v39 = vshrl.u32 %v38, 7
    %v40 = vsub.s32 0, %v39
    %v41 = vrot.slane %v37, %v40
    %v44 = vunpack.c.l.b16 %v35
    %v45 = vunpack.c.l.b16 %v36
    %v46 = vpack.c.b16 %v45, %v44
    %vm48 = vcmask 130048
    %v50 = vsel %vm48, %v33, 0
    %v53 = vsel %vm48, %v34, 0
    %55 = vmatprep.subr.bf16.mxu0 0
    %56 = vmatpush1.bf16.msra.mxu0 %v46
    %57 = vmatprep.subr.bf16.mxu0 0
    %58 = vmatpush1.bf16.msra.mxu0 0
    %59 = vmatprep.subr.bf16.mxu0 0
    %60 = vmatpush1.bf16.msra.mxu0 0
    %61 = vmatprep.subr.bf16.mxu0 0
    %62 = vmatpush1.bf16.msra.mxu0 0
    %63 = vmatprep.subr.bf16.mxu0 0
    %64 = vmatpush1.bf16.msra.mxu0 0
    %65 = vmatprep.subr.bf16.mxu0 0
    %66 = vmatpush1.bf16.msra.mxu0 0
    %67 = vmatprep.subr.bf16.mxu0 0
    %68 = vmatpush1.bf16.msra.mxu0 0
    %69 = vmatprep.subr.bf16.mxu0 0
    %70 = vmatpush1.bf16.msra.mxu0 0
    %71 = vmatprep.subr.bf16.mxu0 0
    %72 = vmatpush1.bf16.msra.mxu0 0
    %73 = vmatprep.subr.bf16.mxu0 0
    %74 = vmatpush1.bf16.msra.mxu0 0
    %75 = vmatprep.subr.bf16.mxu0 0
    %76 = vmatpush1.bf16.msra.mxu0 0
    %77 = vmatprep.subr.bf16.mxu0 0
    %78 = vmatpush1.bf16.msra.mxu0 0
    %79 = vmatprep.subr.bf16.mxu0 0
    %80 = vmatpush1.bf16.msra.mxu0 0
    %81 = vmatprep.subr.bf16.mxu0 0
    %82 = vmatpush1.bf16.msra.mxu0 0
    %83 = vmatprep.subr.bf16.mxu0 0
    %84 = vmatpush1.bf16.msra.mxu0 0
    %85 = vmatprep.subr.bf16.mxu0 0
    %86 = vmatpush1.bf16.msra.mxu0 0
    %87 = vmatprep.mubr.bf16.mxu0 0
    %88 = vmatmul.mubr.bf16.gmra.mrb[0].mxu0 %v50
    %v89 = vpop.f32.mrb[0].mxu0
    %v90 = vadd.f32 %v41, %v89
    %v91 = vpop.f32.mrb[0].mxu0
    %v92 = vpop.f32.mrb[0].mxu0
    %v93 = vadd.f32 %v41, %v92
    %v94 = vpop.f32.mrb[0].mxu0
    %95 = vmatprep.mubr.bf16.mxu0 0
    %96 = vmatmul.mubr.bf16.gmra.mrb[0].mxu0 %v53
    %v97 = vpop.f32.mrb[0].mxu0
    %v98 = vadd.f32 %v41, %v97
    %v99 = vpop.f32.mrb[0].mxu0
    %v100 = vpop.f32.mrb[0].mxu0
    %v101 = vadd.f32 %v41, %v100
    %v102 = vpop.f32.mrb[0].mxu0
    %103 = vdwg.mxu0
    %v104 = vmax.f32 %v90, 0.0
    %v105 = vmax.f32 %v93, 0.0
    %v106 = vmax.f32 %v98, 0.0
    %v107 = vmax.f32 %v101, 0.0
    %v108 = vpack.c.bf16 %v105, %v104
    %v109 = vpack.c.bf16 %v107, %v106
    %s110 = scalar_lea.vmem [#allocation2], 64
    %v111 = vld [vmem:[%s110] sm:$0xf]
    %v112 = vld [vmem:[%s110 + $0x4] sm:$0xf]
    %v113 = vld [vmem:[%s110 + $0x8] sm:$0xf]
    %v114 = vld [vmem:[%s110 + $0xc] sm:$0xf]
    %v115 = vld [vmem:[%s110 + $0x10] sm:$0xf]
    %v116 = vld [vmem:[%s110 + $0x14] sm:$0xf]
    %v117 = vld [vmem:[%s110 + $0x18] sm:$0xf]
    %v118 = vld [vmem:[%s110 + $0x1c] sm:$0xf]
    %v119 = vld [vmem:[%s110 + $0x20] sm:$0xf]
    %v120 = vld [vmem:[%s110 + $0x24] sm:$0xf]
    %v121 = vld [vmem:[%s110 + $0x28] sm:$0xf]
    %v122 = vld [vmem:[%s110 + $0x2c] sm:$0xf]
    %v123 = vld [vmem:[%s110 + $0x30] sm:$0xf]
    %v124 = vld [vmem:[%s110 + $0x34] sm:$0xf]
    %v125 = vld [vmem:[%s110 + $0x38] sm:$0xf]
    %v126 = vld [vmem:[%s110 + $0x3c] sm:$0xf]
    %v127 = vld [vmem:[%s2 + $0x1] sm:$0x1]
    %v128 = vlaneseq
    %v129 = vshrl.u32 %v128, 7
    %v130 = vsub.s32 0, %v129
    %v131 = vrot.slane %v127, %v130
    %v148 = vunpack.c.l.b16 %v111
    %v149 = vunpack.c.l.b16 %v112
    %v150 = vunpack.c.l.b16 %v113
    %v151 = vunpack.c.l.b16 %v114
    %v152 = vunpack.c.l.b16 %v115
    %v153 = vunpack.c.l.b16 %v116
    %v154 = vunpack.c.l.b16 %v117
    %v155 = vunpack.c.l.b16 %v118
    %v156 = vunpack.c.l.b16 %v119
    %v157 = vunpack.c.l.b16 %v120
    %v158 = vunpack.c.l.b16 %v121
    %v159 = vunpack.c.l.b16 %v122
    %v160 = vunpack.c.l.b16 %v123
    %v161 = vunpack.c.l.b16 %v124
    %v162 = vunpack.c.l.b16 %v125
    %v163 = vunpack.c.l.b16 %v126
    %v164 = vpack.c.b16 %v149, %v148
    %v165 = vpack.c.b16 %v151, %v150
    %v166 = vpack.c.b16 %v153, %v152
    %v167 = vpack.c.b16 %v155, %v154
    %v168 = vpack.c.b16 %v157, %v156
    %v169 = vpack.c.b16 %v159, %v158
    %v170 = vpack.c.b16 %v161, %v160
    %v171 = vpack.c.b16 %v163, %v162
    %180 = vmatprep.subr.bf16.mxu0 0
    %181 = vmatpush1.bf16.msra.mxu0 %v164
    %182 = vmatprep.subr.bf16.mxu0 0
    %183 = vmatpush1.bf16.msra.mxu0 %v165
    %184 = vmatprep.subr.bf16.mxu0 0
    %185 = vmatpush1.bf16.msra.mxu0 %v166
    %186 = vmatprep.subr.bf16.mxu0 0
    %187 = vmatpush1.bf16.msra.mxu0 %v167
    %188 = vmatprep.subr.bf16.mxu0 0
    %189 = vmatpush1.bf16.msra.mxu0 %v168
    %190 = vmatprep.subr.bf16.mxu0 0
    %191 = vmatpush1.bf16.msra.mxu0 %v169
    %192 = vmatprep.subr.bf16.mxu0 0
    %193 = vmatpush1.bf16.msra.mxu0 %v170
    %194 = vmatprep.subr.bf16.mxu0 0
    %195 = vmatpush1.bf16.msra.mxu0 %v171
    %196 = vmatprep.subr.bf16.mxu0 0
    %197 = vmatpush1.bf16.msra.mxu0 0
    %198 = vmatprep.subr.bf16.mxu0 0
    %199 = vmatpush1.bf16.msra.mxu0 0
    %200 = vmatprep.subr.bf16.mxu0 0
    %201 = vmatpush1.bf16.msra.mxu0 0
    %202 = vmatprep.subr.bf16.mxu0 0
    %203 = vmatpush1.bf16.msra.mxu0 0
    %204 = vmatprep.subr.bf16.mxu0 0
    %205 = vmatpush1.bf16.msra.mxu0 0
    %206 = vmatprep.subr.bf16.mxu0 0
    %207 = vmatpush1.bf16.msra.mxu0 0
    %208 = vmatprep.subr.bf16.mxu0 0
    %209 = vmatpush1.bf16.msra.mxu0 0
    %210 = vmatprep.subr.bf16.mxu0 0
    %211 = vmatpush1.bf16.msra.mxu0 0
    %212 = vmatprep.mubr.bf16.mxu0 0
    %213 = vmatmul.mubr.bf16.gmra.mrb[0].mxu0 %v108
    %v214 = vpop.f32.mrb[0].mxu0
    %v215 = vadd.f32 %v131, %v214
    %v216 = vpop.f32.mrb[0].mxu0
    %v217 = vpop.f32.mrb[0].mxu0
    %v218 = vadd.f32 %v131, %v217
    %v219 = vpop.f32.mrb[0].mxu0
    %220 = vmatprep.mubr.bf16.mxu0 0
    %221 = vmatmul.mubr.bf16.gmra.mrb[0].mxu0 %v109
    %v222 = vpop.f32.mrb[0].mxu0
    %v223 = vadd.f32 %v131, %v222
    %v224 = vpop.f32.mrb[0].mxu0
    %v225 = vpop.f32.mrb[0].mxu0
    %v226 = vadd.f32 %v131, %v225
    %v227 = vpop.f32.mrb[0].mxu0
    %228 = vdwg.mxu0
    %v229 = vmax.f32 %v215, 0.0
    %v230 = vmax.f32 %v218, 0.0
    %v231 = vmax.f32 %v223, 0.0
    %v232 = vmax.f32 %v226, 0.0
    %v233 = vpack.c.bf16 %v230, %v229
    %v234 = vpack.c.bf16 %v232, %v231
    %s235 = scalar_lea.vmem [#allocation2], 128
    %v236 = vld [vmem:[%s235] sm:$0xf]
    %v237 = vld [vmem:[%s235 + $0x4] sm:$0xf]
    %v238 = vld [vmem:[%s235 + $0x8] sm:$0xf]
    %v239 = vld [vmem:[%s235 + $0xc] sm:$0xf]
    %v240 = vld [vmem:[%s235 + $0x10] sm:$0xf]
    %v241 = vld [vmem:[%s235 + $0x14] sm:$0xf]
    %v242 = vld [vmem:[%s235 + $0x18] sm:$0xf]
    %v243 = vld [vmem:[%s235 + $0x1c] sm:$0xf]
    %v244 = vld [vmem:[%s235 + $0x20] sm:$0xf]
    %v245 = vld [vmem:[%s235 + $0x24] sm:$0xf]
    %v246 = vld [vmem:[%s235 + $0x28] sm:$0xf]
    %v247 = vld [vmem:[%s235 + $0x2c] sm:$0xf]
    %v248 = vld [vmem:[%s235 + $0x30] sm:$0xf]
    %v249 = vld [vmem:[%s235 + $0x34] sm:$0xf]
    %v250 = vld [vmem:[%s235 + $0x38] sm:$0xf]
    %v251 = vld [vmem:[%s235 + $0x3c] sm:$0xf]
    %v252 = vld [vmem:[%s2 + $0x2] sm:$0x1]
    %v253 = vlaneseq
    %v254 = vshrl.u32 %v253, 7
    %v255 = vsub.s32 0, %v254
    %v256 = vrot.slane %v252, %v255
    %v273 = vunpack.c.l.b16 %v236
    %v274 = vunpack.c.l.b16 %v237
    %v275 = vunpack.c.l.b16 %v238
    %v276 = vunpack.c.l.b16 %v239
    %v277 = vunpack.c.l.b16 %v240
    %v278 = vunpack.c.l.b16 %v241
    %v279 = vunpack.c.l.b16 %v242
    %v280 = vunpack.c.l.b16 %v243
    %v281 = vunpack.c.l.b16 %v244
    %v282 = vunpack.c.l.b16 %v245
    %v283 = vunpack.c.l.b16 %v246
    %v284 = vunpack.c.l.b16 %v247
    %v285 = vunpack.c.l.b16 %v248
    %v286 = vunpack.c.l.b16 %v249
    %v287 = vunpack.c.l.b16 %v250
    %v288 = vunpack.c.l.b16 %v251
    %v289 = vpack.c.b16 %v274, %v273
    %v290 = vpack.c.b16 %v276, %v275
    %v291 = vpack.c.b16 %v278, %v277
    %v292 = vpack.c.b16 %v280, %v279
    %v293 = vpack.c.b16 %v282, %v281
    %v294 = vpack.c.b16 %v284, %v283
    %v295 = vpack.c.b16 %v286, %v285
    %v296 = vpack.c.b16 %v288, %v287
    %305 = vmatprep.subr.bf16.mxu0 0
    %306 = vmatpush1.bf16.msra.mxu0 %v289
    %307 = vmatprep.subr.bf16.mxu0 0
    %308 = vmatpush1.bf16.msra.mxu0 %v290
    %309 = vmatprep.subr.bf16.mxu0 0
    %310 = vmatpush1.bf16.msra.mxu0 %v291
    %311 = vmatprep.subr.bf16.mxu0 0
    %312 = vmatpush1.bf16.msra.mxu0 %v292
    %313 = vmatprep.subr.bf16.mxu0 0
    %314 = vmatpush1.bf16.msra.mxu0 %v293
    %315 = vmatprep.subr.bf16.mxu0 0
    %316 = vmatpush1.bf16.msra.mxu0 %v294
    %317 = vmatprep.subr.bf16.mxu0 0
    %318 = vmatpush1.bf16.msra.mxu0 %v295
    %319 = vmatprep.subr.bf16.mxu0 0
    %320 = vmatpush1.bf16.msra.mxu0 %v296
    %321 = vmatprep.subr.bf16.mxu0 0
    %322 = vmatpush1.bf16.msra.mxu0 0
    %323 = vmatprep.subr.bf16.mxu0 0
    %324 = vmatpush1.bf16.msra.mxu0 0
    %325 = vmatprep.subr.bf16.mxu0 0
    %326 = vmatpush1.bf16.msra.mxu0 0
    %327 = vmatprep.subr.bf16.mxu0 0
    %328 = vmatpush1.bf16.msra.mxu0 0
    %329 = vmatprep.subr.bf16.mxu0 0
    %330 = vmatpush1.bf16.msra.mxu0 0
    %331 = vmatprep.subr.bf16.mxu0 0
    %332 = vmatpush1.bf16.msra.mxu0 0
    %333 = vmatprep.subr.bf16.mxu0 0
    %334 = vmatpush1.bf16.msra.mxu0 0
    %335 = vmatprep.subr.bf16.mxu0 0
    %336 = vmatpush1.bf16.msra.mxu0 0
    %337 = vmatprep.mubr.bf16.mxu0 0
    %338 = vmatmul.mubr.bf16.gmra.mrb[0].mxu0 %v233
    %v339 = vpop.f32.mrb[0].mxu0
    %v340 = vadd.f32 %v256, %v339
    %v341 = vpop.f32.mrb[0].mxu0
    %v342 = vpop.f32.mrb[0].mxu0
    %v343 = vadd.f32 %v256, %v342
    %v344 = vpop.f32.mrb[0].mxu0
    %345 = vmatprep.mubr.bf16.mxu0 0
    %346 = vmatmul.mubr.bf16.gmra.mrb[0].mxu0 %v234
    %v347 = vpop.f32.mrb[0].mxu0
    %v348 = vadd.f32 %v256, %v347
    %v349 = vpop.f32.mrb[0].mxu0
    %v350 = vpop.f32.mrb[0].mxu0
    %v351 = vadd.f32 %v256, %v350
    %v352 = vpop.f32.mrb[0].mxu0
    %353 = vdwg.mxu0
    %v354 = vmax.f32 %v340, 0.0
    %v355 = vmax.f32 %v343, 0.0
    %v356 = vmax.f32 %v348, 0.0
    %v357 = vmax.f32 %v351, 0.0
    %v358 = vpack.c.bf16 %v355, %v354
    %v359 = vpack.c.bf16 %v357, %v356
    %s360 = scalar_lea.vmem [#allocation2], 192
    %v361 = vld [vmem:[%s360] sm:$0xf]
    %v362 = vld [vmem:[%s360 + $0x4] sm:$0xf]
    %v363 = vld [vmem:[%s360 + $0x8] sm:$0xf]
    %v364 = vld [vmem:[%s360 + $0xc] sm:$0xf]
    %v365 = vld [vmem:[%s360 + $0x10] sm:$0xf]
    %v366 = vld [vmem:[%s360 + $0x14] sm:$0xf]
    %v367 = vld [vmem:[%s360 + $0x18] sm:$0xf]
    %v368 = vld [vmem:[%s360 + $0x1c] sm:$0xf]
    %v369 = vld [vmem:[%s360 + $0x20] sm:$0xf]
    %v370 = vld [vmem:[%s360 + $0x24] sm:$0xf]
    %v371 = vld [vmem:[%s360 + $0x28] sm:$0xf]
    %v372 = vld [vmem:[%s360 + $0x2c] sm:$0xf]
    %v373 = vld [vmem:[%s360 + $0x30] sm:$0xf]
    %v374 = vld [vmem:[%s360 + $0x34] sm:$0xf]
    %v375 = vld [vmem:[%s360 + $0x38] sm:$0xf]
    %v376 = vld [vmem:[%s360 + $0x3c] sm:$0xf]
    %v377 = vld [vmem:[%s2 + $0x3] sm:$0x1]
    %v378 = vlaneseq
    %v379 = vshrl.u32 %v378, 7
    %v380 = vsub.s32 0, %v379
    %v381 = vrot.slane %v377, %v380
    %v398 = vunpack.c.l.b16 %v361
    %v399 = vunpack.c.l.b16 %v362
    %v400 = vunpack.c.l.b16 %v363
    %v401 = vunpack.c.l.b16 %v364
    %v402 = vunpack.c.l.b16 %v365
    %v403 = vunpack.c.l.b16 %v366
    %v404 = vunpack.c.l.b16 %v367
    %v405 = vunpack.c.l.b16 %v368
    %v406 = vunpack.c.l.b16 %v369
    %v407 = vunpack.c.l.b16 %v370
    %v408 = vunpack.c.l.b16 %v371
    %v409 = vunpack.c.l.b16 %v372
    %v410 = vunpack.c.l.b16 %v373
    %v411 = vunpack.c.l.b16 %v374
    %v412 = vunpack.c.l.b16 %v375
    %v413 = vunpack.c.l.b16 %v376
    %v414 = vpack.c.b16 %v399, %v398
    %v415 = vpack.c.b16 %v401, %v400
    %v416 = vpack.c.b16 %v403, %v402
    %v417 = vpack.c.b16 %v405, %v404
    %v418 = vpack.c.b16 %v407, %v406
    %v419 = vpack.c.b16 %v409, %v408
    %v420 = vpack.c.b16 %v411, %v410
    %v421 = vpack.c.b16 %v413, %v412
    %430 = vmatprep.subr.bf16.mxu0 0
    %431 = vmatpush1.bf16.msra.mxu0 %v414
    %432 = vmatprep.subr.bf16.mxu0 0
    %433 = vmatpush1.bf16.msra.mxu0 %v415
    %434 = vmatprep.subr.bf16.mxu0 0
    %435 = vmatpush1.bf16.msra.mxu0 %v416
    %436 = vmatprep.subr.bf16.mxu0 0
    %437 = vmatpush1.bf16.msra.mxu0 %v417
    %438 = vmatprep.subr.bf16.mxu0 0
    %439 = vmatpush1.bf16.msra.mxu0 %v418
    %440 = vmatprep.subr.bf16.mxu0 0
    %441 = vmatpush1.bf16.msra.mxu0 %v419
    %442 = vmatprep.subr.bf16.mxu0 0
    %443 = vmatpush1.bf16.msra.mxu0 %v420
    %444 = vmatprep.subr.bf16.mxu0 0
    %445 = vmatpush1.bf16.msra.mxu0 %v421
    %446 = vmatprep.subr.bf16.mxu0 0
    %447 = vmatpush1.bf16.msra.mxu0 0
    %448 = vmatprep.subr.bf16.mxu0 0
    %449 = vmatpush1.bf16.msra.mxu0 0
    %450 = vmatprep.subr.bf16.mxu0 0
    %451 = vmatpush1.bf16.msra.mxu0 0
    %452 = vmatprep.subr.bf16.mxu0 0
    %453 = vmatpush1.bf16.msra.mxu0 0
    %454 = vmatprep.subr.bf16.mxu0 0
    %455 = vmatpush1.bf16.msra.mxu0 0
    %456 = vmatprep.subr.bf16.mxu0 0
    %457 = vmatpush1.bf16.msra.mxu0 0
    %458 = vmatprep.subr.bf16.mxu0 0
    %459 = vmatpush1.bf16.msra.mxu0 0
    %460 = vmatprep.subr.bf16.mxu0 0
    %461 = vmatpush1.bf16.msra.mxu0 0
    %462 = vmatprep.mubr.bf16.mxu0 0
    %463 = vmatmul.mubr.bf16.gmra.mrb[0].mxu0 %v358
    %v464 = vpop.f32.mrb[0].mxu0
    %v465 = vadd.f32 %v381, %v464
    %v466 = vpop.f32.mrb[0].mxu0
    %v467 = vpop.f32.mrb[0].mxu0
    %v468 = vadd.f32 %v381, %v467
    %v469 = vpop.f32.mrb[0].mxu0
    %470 = vmatprep.mubr.bf16.mxu0 0
    %471 = vmatmul.mubr.bf16.gmra.mrb[0].mxu0 %v359
    %v472 = vpop.f32.mrb[0].mxu0
    %v473 = vadd.f32 %v381, %v472
    %v474 = vpop.f32.mrb[0].mxu0
    %v475 = vpop.f32.mrb[0].mxu0
    %v476 = vadd.f32 %v381, %v475
    %v477 = vpop.f32.mrb[0].mxu0
    %478 = vdwg.mxu0
    %vm479 = vcmask 31744
    %480 = vst.msk [vmem:[%s3] sm:$0xff] %vm479, %v465
    %481 = vst.msk [vmem:[%s3 + $0x8] sm:$0xff] %vm479, %v468
    %482 = vst.msk [vmem:[%s3 + $0x10] sm:$0xff] %vm479, %v473
    %483 = vst.msk [vmem:[%s3 + $0x18] sm:$0xff] %vm479, %v476
    // Predicated region
    $region18: #{generator_forward.1} parent=1 // pred_check
      _
    $region19: #{generator_forward.1} parent=1 // pred_check_branch
      %485 = sbr.rel (0) target = $region21
    $region20: #{generator_forward.1} parent=1 // pred_region
      _
    $region21: #{generator_forward.1} parent=1 // pred_fallthru
      _
    // Predicated region
    $region22: #{generator_forward.1} parent=1 // pred_check
      _
    $region23: #{generator_forward.1} parent=1 // pred_check_branch
      %487 = sbr.rel (0) target = $region25
    $region24: #{generator_forward.1} parent=1 // pred_region
      _
    $region25: #{generator_forward.1} parent=1 // pred_fallthru
      _
    %488 = vsyncpa [#allocation3], 1

</llo_original>
